<compile_context>
chip_gen: v7x
topology: tpu7x:2x2x1
jax: 0.10.0
libtpu: 0.0.40
codegen_flags: <defaults>
</compile_context>

<pallas_src>
import jax
import jax.numpy as jnp
from jax import lax
from jax.experimental import pallas as pl
from jax.experimental.pallas import tpu as pltpu

EPS = 1e-5  # nn.BatchNorm2d default eps


# ----------------------------------------------------------------------------
# In-kernel helpers
# ----------------------------------------------------------------------------
def _conv3x3_rows(img, wb_ref):
    """3x3 'same' conv of one lane-dense image tile: ONE stacked-K MXU matmul.

    img    : (H, L) rows, lanes channel-major (lane = c*W + x).
    wb_ref : (3*L, Lout) banded weights; row block dy holds vertical tap dy,
             horizontal taps + zero column padding folded into the band.

    Vertical taps use pltpu.roll on the sublane axis (XLU slot, overlaps the
    MXU) + halo-row zero masks -- no misaligned slices, no padded scratch.
    """
    h = img.shape[0]
    img = img.astype(wb_ref.dtype)
    row = lax.broadcasted_iota(jnp.int32, img.shape, 0)
    # tap dy=0 reads input row h-1 (zero at the top border)
    down = jnp.where(row == 0, 0.0, pltpu.roll(img, shift=1, axis=0))
    # tap dy=2 reads input row h+1 (zero at the bottom border)
    up = jnp.where(row == h - 1, 0.0, pltpu.roll(img, shift=h - 1, axis=0))
    xcat = jnp.concatenate([down, img, up], axis=-1)          # (H, 3L)
    return jnp.dot(xcat, wb_ref[...], preferred_element_type=jnp.float32)


def _col_stats(y):
    """Per-lane (sum, sum-of-squares) of an (H, Lout) f32 tile -> (2, Lout)."""
    return jnp.concatenate([jnp.sum(y, axis=0, keepdims=True),
                            jnp.sum(y * y, axis=0, keepdims=True)], axis=0)


# ----------------------------------------------------------------------------
# Kernels
# ----------------------------------------------------------------------------
def conv1_kernel(x_ref, wb_ref, y_ref, stats_ref):
    """Pass 1: NCHW image block -> lane-dense -> conv1 -> raw out + partials."""
    cin = x_ref.shape[1]
    # NCHW -> lane-dense (H, W*Cin), channel-major lanes: plain per-channel
    # lane concat, no host-side transpose / pad pass over the activation.
    img = jnp.concatenate([x_ref[0, ci, :, :] for ci in range(cin)], axis=-1)
    y = _conv3x3_rows(img, wb_ref)                            # (H, Lout) f32
    y_ref[0, :, :] = y
    stats_ref[0, :, :] = _col_stats(y)                        # BN1 partials


def conv2_kernel(y1_ref, scale_ref, shift_ref, wb_ref, y_ref, stats_ref):
    """Pass 2: BN1 affine + ReLU fused into the input read, conv2 + partials."""
    img = jnp.maximum(y1_ref[0, :, :] * scale_ref[...] + shift_ref[...], 0.0)
    y = _conv3x3_rows(img, wb_ref)                            # (H, Lout) f32
    y_ref[0, :, :] = y
    stats_ref[0, :, :] = _col_stats(y)                        # BN2 partials


def bn_relu_nchw_kernel(y_ref, scale_ref, shift_ref, o_ref):
    """Pass 3: BN2 affine + ReLU on a lane-dense row tile, stored as NCHW."""
    cout, w = o_ref.shape[1], o_ref.shape[3]
    y = jnp.maximum(y_ref[0, :, :] * scale_ref[...] + shift_ref[...], 0.0)
    for co in range(cout):                                    # lane-dense -> NCHW
        o_ref[0, co, :, :] = y[:, co * w:(co + 1) * w]


# ----------------------------------------------------------------------------
# Host-side (tiny, per-channel) helpers
# ----------------------------------------------------------------------------
def _banded_weights(w_hwio, wd):
    """(3,3,Cin,Cout) HWIO conv weights -> (3*Wd*Cin, Wd*Cout) stacked band.

    Channel-major lanes (lane = c*Wd + x).  Row block dy is vertical tap dy;
    within a block B[ci*Wd + xi, co*Wd + xo] = w[dy, xi-xo+1, ci, co] for
    |xi-xo| <= 1, else 0 (zero column padding folded in), so the whole 3x3
    conv is one MXU contraction with K = 3*Wd*Cin.
    """
    _, _, cin, cout = w_hwio.shape
    xi = jnp.arange(wd)[:, None]
    xo = jnp.arange(wd)[None, :]
    d = xi - xo + 1
    valid = (d >= 0) & (d <= 2)
    mats = []
    for dy in range(3):
        tap = w_hwio[dy][jnp.clip(d, 0, 2)]                   # (Wd, Wd, Cin, Cout)
        tap = jnp.where(valid[:, :, None, None], tap, 0.0)
        # (xi, xo, ci, co) -> (ci, xi, co, xo) -> (Wd*Cin, Wd*Cout)
        mats.append(tap.transpose(2, 0, 3, 1).reshape(wd * cin, wd * cout))
    return jnp.concatenate(mats, axis=0)


def _bn_lane_affine(stats, gamma, beta, count, wd):
    """Per-image (sum, sumsq) partials -> per-lane BN scale / shift vectors.

    Train-mode (biased) batch statistics, matching nn.BatchNorm2d.forward.
    TODO(synk): switch to a shifted / two-pass variance if activations ever
    have |mean| >> std (single-pass E[x^2]-E[x]^2 cancellation).
    """
    cout = gamma.shape[-1]
    s = jnp.sum(stats, axis=0)                                # (2, Lout)
    per_ch = s.reshape(2, cout, wd).sum(axis=-1)              # (2, Cout)
    mean = per_ch[0] / count
    var = per_ch[1] / count - mean * mean
    scale = gamma.reshape(-1) * lax.rsqrt(var + EPS)          # (Cout,)
    shift = beta.reshape(-1) - mean * scale
    return (jnp.repeat(scale, wd)[None, :].astype(jnp.float32),
            jnp.repeat(shift, wd)[None, :].astype(jnp.float32))


def _vmem_limit_bytes():
    """Per-generation VMEM request: ~75% of physical, capped at 96 MiB.

    v7x has 64 MiB/TC (-> 48 MiB request, headroom for double buffers and
    compiler scratch); v5e/v6e have 128 MiB (-> 96 MiB).
    """
    cap = 128 * 1024 * 1024
    try:
        cap = int(getattr(pltpu.get_tpu_info(), "vmem_capacity_bytes", cap))
    except Exception:
        pass
    return min(cap * 3 // 4, 96 * 1024 * 1024)


# ----------------------------------------------------------------------------
# Wrapper (NCHW in / NCHW out, matching the PyTorch module's forward)
# ----------------------------------------------------------------------------
def double_conv(x_nchw, params, mxu_dtype=jnp.bfloat16):
    N, Cin, H, W = x_nchw.shape
    Cout = params["w1"].shape[-1]
    Lin, Lout = W * Cin, W * Cout
    count = float(N * H * W)

    # Conv biases intentionally dropped: exactly cancelled by the train-mode
    # BatchNorm mean subtraction that follows each conv.
    wb1 = _banded_weights(params["w1"], W).astype(mxu_dtype)  # (3*Lin,  Lout)
    wb2 = _banded_weights(params["w2"], W).astype(mxu_dtype)  # (3*Lout, Lout)

    vmem = _vmem_limit_bytes()
    x32 = x_nchw.astype(jnp.float32)

    # Pass 1: conv1 + per-image BN1 partial statistics.  Grid over images is
    # fully "parallel": each step owns its own stats block (no accumulator),
    # so it shards over both v7x TensorCores and pipelines the DMA.
    y1_raw, st1 = pl.pallas_call(
        conv1_kernel,
        grid=(N,),
        in_specs=[pl.BlockSpec((1, Cin, H, W), lambda n: (n, 0, 0, 0)),
                  pl.BlockSpec((3 * Lin, Lout), lambda n: (0, 0))],
        out_specs=[pl.BlockSpec((1, H, Lout), lambda n: (n, 0, 0)),
                   pl.BlockSpec((1, 2, Lout), lambda n: (n, 0, 0))],
        out_shape=[jax.ShapeDtypeStruct((N, H, Lout), jnp.float32),
                   jax.ShapeDtypeStruct((N, 2, Lout), jnp.float32)],
        compiler_params=pltpu.CompilerParams(
            dimension_semantics=("parallel",), vmem_limit_bytes=vmem),
        cost_estimate=pl.CostEstimate(
            flops=2 * N * H * (3 * Lin) * Lout,
            transcendentals=0,
            bytes_accessed=4 * (x32.size + N * H * Lout + N * 2 * Lout)
            + wb1.size * wb1.dtype.itemsize),
    )(x32, wb1)

    sc1, sh1 = _bn_lane_affine(st1, params["g1"], params["be1"], count, W)

    # Pass 2: BN1 + ReLU folded into the conv2 input read, conv2 + BN2 stats.
    y2_raw, st2 = pl.pallas_call(
        conv2_kernel,
        grid=(N,),
        in_specs=[pl.BlockSpec((1, H, Lout), lambda n: (n, 0, 0)),
                  pl.BlockSpec((1, Lout), lambda n: (0, 0)),
                  pl.BlockSpec((1, Lout), lambda n: (0, 0)),
                  pl.BlockSpec((3 * Lout, Lout), lambda n: (0, 0))],
        out_specs=[pl.BlockSpec((1, H, Lout), lambda n: (n, 0, 0)),
                   pl.BlockSpec((1, 2, Lout), lambda n: (n, 0, 0))],
        out_shape=[jax.ShapeDtypeStruct((N, H, Lout), jnp.float32),
                   jax.ShapeDtypeStruct((N, 2, Lout), jnp.float32)],
        compiler_params=pltpu.CompilerParams(
            dimension_semantics=("parallel",), vmem_limit_bytes=vmem),
        cost_estimate=pl.CostEstimate(
            flops=2 * N * H * (3 * Lout) * Lout + 3 * N * H * Lout,
            transcendentals=0,
            bytes_accessed=4 * (2 * N * H * Lout + N * 2 * Lout + 2 * Lout)
            + wb2.size * wb2.dtype.itemsize),
    )(y1_raw, sc1, sh1, wb2)

    sc2, sh2 = _bn_lane_affine(st2, params["g2"], params["be2"], count, W)

    # Pass 3: BN2 + ReLU over lane-dense row tiles (128-lane input blocks),
    # written back as NCHW inside the kernel (no host-side transpose pass).
    TR = 8 if H % 8 == 0 else H
    out = pl.pallas_call(
        bn_relu_nchw_kernel,
        grid=(N, H // TR),
        in_specs=[pl.BlockSpec((1, TR, Lout), lambda n, t: (n, t, 0)),
                  pl.BlockSpec((1, Lout), lambda n, t: (0, 0)),
                  pl.BlockSpec((1, Lout), lambda n, t: (0, 0))],
        out_specs=pl.BlockSpec((1, Cout, TR, W), lambda n, t: (n, 0, t, 0)),
        out_shape=jax.ShapeDtypeStruct((N, Cout, H, W), jnp.float32),
        compiler_params=pltpu.CompilerParams(
            dimension_semantics=("parallel", "parallel"),
            vmem_limit_bytes=vmem),
        cost_estimate=pl.CostEstimate(
            flops=3 * N * H * Lout, transcendentals=0,
            bytes_accessed=4 * 2 * N * H * Lout),
    )(y2_raw, sc2, sh2)

    return out


# ----------------------------------------------------------------------------
# Pure-JAX reference (matches PyTorch forward in training mode, incl. bias)
# ----------------------------------------------------------------------------
def ref_double_conv(x_nchw, params):
    def conv(x, w_hwio, b):
        w_oihw = jnp.transpose(w_hwio, (3, 2, 0, 1))
        y = lax.conv_general_dilated(
            x, w_oihw, window_strides=(1, 1), padding=((1, 1), (1, 1)),
            dimension_numbers=("NCHW", "OIHW", "NCHW"))
        return y + b.reshape(1, -1, 1, 1)

    def bn_relu(y, g, be):
        mean = jnp.mean(y, axis=(0, 2, 3), keepdims=True)
        var = jnp.mean((y - mean) ** 2, axis=(0, 2, 3), keepdims=True)
        yhat = (y - mean) * lax.rsqrt(var + EPS)
        return jnp.maximum(yhat * g.reshape(1, -1, 1, 1)
                           + be.reshape(1, -1, 1, 1), 0.0)

    y = bn_relu(conv(x_nchw, params["w1"], params["b1"][0]),
                params["g1"][0], params["be1"][0])
    y = bn_relu(conv(y, params["w2"], params["b2"][0]),
                params["g2"][0], params["be2"][0])
    return y


def init_params(key, in_channels, out_channels):
    """Mimics nn.Conv2d (uniform +/- 1/sqrt(fan_in)) and nn.BatchNorm2d."""
    k1, k2, k3, k4 = jax.random.split(key, 4)
    b1_bound = 1.0 / jnp.sqrt(in_channels * 9.0)
    b2_bound = 1.0 / jnp.sqrt(out_channels * 9.0)
    return {
        "w1": jax.random.uniform(k1, (3, 3, in_channels, out_channels),
                                 jnp.float32, -b1_bound, b1_bound),
        "b1": jax.random.uniform(k2, (1, out_channels),
                                 jnp.float32, -b1_bound, b1_bound),
        "g1": jnp.ones((1, out_channels), jnp.float32),
        "be1": jnp.zeros((1, out_channels), jnp.float32),
        "w2": jax.random.uniform(k3, (3, 3, out_channels, out_channels),
                                 jnp.float32, -b2_bound, b2_bound),
        "b2": jax.random.uniform(k4, (1, out_channels),
                                 jnp.float32, -b2_bound, b2_bound),
        "g2": jnp.ones((1, out_channels), jnp.float32),
        "be2": jnp.zeros((1, out_channels), jnp.float32),
    }


if __name__ == "__main__":
    key = jax.random.PRNGKey(0)
    kx, kp = jax.random.split(key)

    N, Cin, Cout, H, W = 2, 4, 8, 16, 16
    x = jax.random.normal(kx, (N, Cin, H, W), jnp.float32)
    params = init_params(kp, Cin, Cout)

    ref = jax.block_until_ready(ref_double_conv(x, params))

    # Bit-careful path: f32 MXU operands -> tight tolerance (algorithm check).
    out_f32 = jax.block_until_ready(
        double_conv(x, params, mxu_dtype=jnp.float32))
    assert out_f32.shape == (N, Cout, H, W)
    err32 = float(jnp.max(jnp.abs(out_f32 - ref)))
    assert jnp.allclose(out_f32, ref, atol=3e-4, rtol=3e-4), \
        f"f32 path max abs err {err32}"

    # Default fast path: bf16 MXU operands / f32 accumulation (native MXU
    # dtype on v6e/v7x).  BatchNorm renormalization keeps the error small,
    # but the tolerance is necessarily looser than the f32 path.
    out_bf16 = jax.block_until_ready(double_conv(x, params))
    errbf = float(jnp.max(jnp.abs(out_bf16 - ref)))
    assert jnp.allclose(out_bf16, ref, atol=5e-2, rtol=5e-2), \
        f"bf16 path max abs err {errbf}"

    print("KERNEL_OK")
</pallas_src>

<mosaic_0001>
module attributes {stable_mosaic.version = 11 : i64} {
  func.func @conv1_kernel(%arg0: i32, %arg1: memref<1x4x16x16xf32, #tpu.memory_space<vmem>>, %arg2: memref<192x128xf32, #tpu.memory_space<vmem>>, %arg3: memref<1x16x128xf32, #tpu.memory_space<vmem>>, %arg4: memref<1x2x128xf32, #tpu.memory_space<vmem>>) attributes {dimension_semantics = [#tpu.dimension_semantics<parallel>], iteration_bounds = array<i64: 2>, scalar_prefetch = 0 : i64, scratch_operands = 0 : i64, tpu.core_type = #tpu.core_type<tc>, window_params = [{transform_indices = @transform_0, window_bounds = array<i64: 1, 4, 16, 16>}, {pipeline_mode = #tpu.pipeline_mode<synchronous>, transform_indices = @transform_1, window_bounds = array<i64: 192, 128>}, {transform_indices = @transform_2, window_bounds = array<i64: 1, 16, 128>}, {transform_indices = @transform_3, window_bounds = array<i64: 1, 2, 128>}]} {
    %c0 = arith.constant 0 : index
    %c0_0 = arith.constant 0 : index
    %c0_1 = arith.constant 0 : index
    %c0_2 = arith.constant 0 : index
    %0 = vector.load %arg1[%c0, %c0_0, %c0_1, %c0_2] : memref<1x4x16x16xf32, #tpu.memory_space<vmem>>, vector<1x1x16x16xf32>
    %1 = vector.shape_cast %0 : vector<1x1x16x16xf32> to vector<16x16xf32>
    %c0_3 = arith.constant 0 : index
    %c1 = arith.constant 1 : index
    %c0_4 = arith.constant 0 : index
    %c0_5 = arith.constant 0 : index
    %2 = vector.load %arg1[%c0_3, %c1, %c0_4, %c0_5] : memref<1x4x16x16xf32, #tpu.memory_space<vmem>>, vector<1x1x16x16xf32>
    %3 = vector.shape_cast %2 : vector<1x1x16x16xf32> to vector<16x16xf32>
    %c0_6 = arith.constant 0 : index
    %c2 = arith.constant 2 : index
    %c0_7 = arith.constant 0 : index
    %c0_8 = arith.constant 0 : index
    %4 = vector.load %arg1[%c0_6, %c2, %c0_7, %c0_8] : memref<1x4x16x16xf32, #tpu.memory_space<vmem>>, vector<1x1x16x16xf32>
    %5 = vector.shape_cast %4 : vector<1x1x16x16xf32> to vector<16x16xf32>
    %c0_9 = arith.constant 0 : index
    %c3 = arith.constant 3 : index
    %c0_10 = arith.constant 0 : index
    %c0_11 = arith.constant 0 : index
    %6 = vector.load %arg1[%c0_9, %c3, %c0_10, %c0_11] : memref<1x4x16x16xf32, #tpu.memory_space<vmem>>, vector<1x1x16x16xf32>
    %7 = vector.shape_cast %6 : vector<1x1x16x16xf32> to vector<16x16xf32>
    %8 = tpu.concatenate %1, %3, %5, %7 in 1 : vector<16x16xf32>, vector<16x16xf32>, vector<16x16xf32>, vector<16x16xf32> -> vector<16x64xf32>
    %9 = tpu.iota {dimensions = array<i32: 0>} : vector<16x64xi32>
    %c0_i32 = arith.constant 0 : i32
    %10 = vector.broadcast %c0_i32 : i32 to vector<16x64xi32>
    %11 = arith.cmpi eq, %9, %10 : vector<16x64xi32>
    %c1_i32 = arith.constant 1 : i32
    %12 = tpu.dynamic_rotate %8 by %c1_i32 dim 0 : vector<16x64xf32>, i32 -> vector<16x64xf32>
    %cst = arith.constant 0.000000e+00 : f32
    %13 = vector.broadcast %cst : f32 to vector<16x64xf32>
    %14 = arith.select %11, %13, %12 : vector<16x64xi1>, vector<16x64xf32>
    %c15_i32 = arith.constant 15 : i32
    %15 = vector.broadcast %c15_i32 : i32 to vector<16x64xi32>
    %16 = arith.cmpi eq, %9, %15 : vector<16x64xi32>
    %c15_i32_12 = arith.constant 15 : i32
    %17 = tpu.dynamic_rotate %8 by %c15_i32_12 dim 0 : vector<16x64xf32>, i32 -> vector<16x64xf32>
    %cst_13 = arith.constant 0.000000e+00 : f32
    %18 = vector.broadcast %cst_13 : f32 to vector<16x64xf32>
    %19 = arith.select %16, %18, %17 : vector<16x64xi1>, vector<16x64xf32>
    %20 = tpu.concatenate %14, %8, %19 in 1 : vector<16x64xf32>, vector<16x64xf32>, vector<16x64xf32> -> vector<16x192xf32>
    %c0_14 = arith.constant 0 : index
    %c0_15 = arith.constant 0 : index
    %21 = vector.load %arg2[%c0_14, %c0_15] : memref<192x128xf32, #tpu.memory_space<vmem>>, vector<192x128xf32>
    %cst_16 = arith.constant dense<0.000000e+00> : vector<16x128xf32>
    %22 = tpu.matmul %20, %21, %cst_16 {dimension_numbers = #tpu.dot_dimension_numbers<[1], [0], [0], [1], [0, 0, 1, 1], [], []>} : vector<16x192xf32>, vector<192x128xf32>, vector<16x128xf32> -> vector<16x128xf32>
    %c0_17 = arith.constant 0 : index
    %c0_18 = arith.constant 0 : index
    %c0_19 = arith.constant 0 : index
    %23 = vector.load %arg3[%c0_17, %c0_18, %c0_19] : memref<1x16x128xf32, #tpu.memory_space<vmem>>, vector<1x16x128xf32>
    %24 = vector.shape_cast %23 : vector<1x16x128xf32> to vector<16x128xf32>
    %25 = vector.shape_cast %22 : vector<16x128xf32> to vector<1x16x128xf32>
    tpu.vector_store %arg3[%c0_17, %c0_18, %c0_19], %25 {strides = array<i32>} : memref<1x16x128xf32, #tpu.memory_space<vmem>>, vector<1x16x128xf32>,
    %cst_20 = arith.constant dense<0.000000e+00> : vector<128xf32>
    %26 = vector.multi_reduction <add>, %22, %cst_20 [0] : vector<16x128xf32> to vector<128xf32>
    %27 = vector.shape_cast %26 : vector<128xf32> to vector<1x128xf32>
    %28 = arith.mulf %22, %22 : vector<16x128xf32>
    %cst_21 = arith.constant dense<0.000000e+00> : vector<128xf32>
    %29 = vector.multi_reduction <add>, %28, %cst_21 [0] : vector<16x128xf32> to vector<128xf32>
    %30 = vector.shape_cast %29 : vector<128xf32> to vector<1x128xf32>
    %31 = tpu.concatenate %27, %30 in 0 : vector<1x128xf32>, vector<1x128xf32> -> vector<2x128xf32>
    %c0_22 = arith.constant 0 : index
    %c0_23 = arith.constant 0 : index
    %c0_24 = arith.constant 0 : index
    %32 = vector.load %arg4[%c0_22, %c0_23, %c0_24] : memref<1x2x128xf32, #tpu.memory_space<vmem>>, vector<1x2x128xf32>
    %33 = vector.shape_cast %32 : vector<1x2x128xf32> to vector<2x128xf32>
    %34 = vector.shape_cast %31 : vector<2x128xf32> to vector<1x2x128xf32>
    tpu.vector_store %arg4[%c0_22, %c0_23, %c0_24], %34 {strides = array<i32>} : memref<1x2x128xf32, #tpu.memory_space<vmem>>, vector<1x2x128xf32>,
    return
  }
  func.func @transform_0(%arg0: i32) -> (i32, i32, i32, i32) {
    %c0_i32 = arith.constant 0 : i32
    %c0_i32_0 = arith.constant 0 : i32
    %c0_i32_1 = arith.constant 0 : i32
    %c0_i32_2 = arith.constant 0 : i32
    return %arg0, %c0_i32, %c0_i32_0, %c0_i32_1 : i32, i32, i32, i32
  }
  func.func @transform_1(%arg0: i32) -> (i32, i32) {
    %c0_i32 = arith.constant 0 : i32
    %c0_i32_0 = arith.constant 0 : i32
    %c0_i32_1 = arith.constant 0 : i32
    return %c0_i32, %c0_i32_0 : i32, i32
  }
  func.func @transform_2(%arg0: i32) -> (i32, i32, i32) {
    %c0_i32 = arith.constant 0 : i32
    %c0_i32_0 = arith.constant 0 : i32
    %c0_i32_1 = arith.constant 0 : i32
    return %arg0, %c0_i32, %c0_i32_0 : i32, i32, i32
  }
  func.func @transform_3(%arg0: i32) -> (i32, i32, i32) {
    %c0_i32 = arith.constant 0 : i32
    %c0_i32_0 = arith.constant 0 : i32
    %c0_i32_1 = arith.constant 0 : i32
    return %arg0, %c0_i32, %c0_i32_0 : i32, i32, i32
  }
}

</mosaic_0001>

<llo_original>
// kernel: tpu_custom_call.1
$region0: #{tpu_custom_call.1}
  #allocation0 [shape = 'u32[]', space=smem, size = 0x4, offset = 0x4, fixed_abs, tag = 'smem constant byte address 0x4 - core index']
  #allocation1 [shape = 'u32[144,128]{1,0:T(1,128)}', space=vmem, size = 0x12000, scoped, tag = 'internal scratch']
  %s0 = inlined_call_operand.hbm [shape: f32[2,4,16,16], index: 0, kind: input, shape index: {}]
  %s1 = inlined_call_operand.hbm [shape: f32[192,128], index: 1, kind: input, shape index: {}]
  %s2 = inlined_call_operand.hbm [shape: f32[2,16,128], index: 2, kind: output, shape index: {0}]
  %s3 = inlined_call_operand.hbm [shape: f32[2,2,128], index: 3, kind: output, shape index: {1}]
  %4 = xla_tuple %s2, %s3
  %s5 = sld [smem:[#allocation0]]
  $region57: #{tpu_custom_call.1} parent=0
    _
  %s7 = ssub.s32 1, %s5
  %s8 = scalar_select 0, %s7, %s5
  $region1: #{tpu_custom_call.1} parent=0
    #allocation2 [shape = 'u8[65536]{0}', space=vmem, size = 0x10000, scoped, tag = 'input window, operand 0']
    #allocation3 [shape = 's32[2]{0}', space=sflag, size = 0x8, scoped, tag = 'scoped memory for tpu_custom_call.1']
    #allocation4 [shape = 's32[2]{0}', space=sflag, size = 0x8, scoped, tag = 'scoped memory for tpu_custom_call.1']
    #allocation5 [shape = 'u8[98304]{0}', space=vmem, size = 0x18000, scoped, tag = 'input window, operand 1, single buffered']
    #allocation6 [shape = 's32[1]{0}', space=sflag, size = 0x4, scoped, tag = 'scoped memory for tpu_custom_call.1']
    #allocation7 [shape = 'u8[16384]{0}', space=vmem, size = 0x4000, scoped, tag = 'output window, operand 0']
    #allocation8 [shape = 'u8[2048]{0}', space=vmem, size = 0x800, scoped, tag = 'output window, operand 1']
    #allocation9 [shape = 's32[2]{0}', space=sflag, size = 0x8, scoped, tag = 'scoped memory for tpu_custom_call.1']
    %9 = vsyncpa [#allocation3], 0
    %s10 = scalar_lea.sflag [#allocation3], 1
    %11 = vsyncpa %s10, 0
    %12 = vsyncpa [#allocation6], 0
    %13 = vsyncpa [#allocation4], 0
    %s14 = scalar_lea.sflag [#allocation4], 1
    %15 = vsyncpa %s14, 0
    %16 = vsyncpa [#allocation9], 0
    %s17 = scalar_lea.sflag [#allocation9], 1
    %18 = vsyncpa %s17, 0
    loop: start=0, step=1, limit=4
    $region2: #{tpu_custom_call.1} parent=1 // loop_pre_header
      _
    $region3: #{tpu_custom_call.1} parent=1 // loop_header
      %s20 = sphi 0, %s24
      %p21 = scmp.ge.s32.totalorder %s20, 4
      %s30 = sphi 0, %s32
      %s33 = sphi 0, %s30
      %s34 = sphi 0, %s33
      %s50 = sphi 0, %s34
      %s54 = sphi 0, %s54
      %s56 = sphi 0, %s54
      %s57 = sphi 0, %s56
      %s71 = sphi 0, %s57
      %s77 = sphi 0, %s79
      %s80 = sphi 0, %s77
      %s81 = sphi 0, %s80
      %s97 = sphi 0, %s81
      %s103 = sphi 0, %s105
      %s106 = sphi 0, %s103
      %s107 = sphi 0, %s106
      %s123 = sphi 0, %s107
    $region4: #{tpu_custom_call.1} parent=1 // loop_header_branch
      %23 = sbr.rel (%p21) target = $region8
    $region5: #{tpu_custom_call.1} parent=1 // loop_body
      %s25 = ssub.s32 %s20, 1
      %s26 = ssub.s32 %s20, 2
      %s27 = sadd.s32 %s20, 1
      %s28 = ssub.s32 %s20, %s27
      %p29 = scmp.eq.s32.totalorder %s28, 0
      %s31 = sadd.s32 %s30, 1
      %s32 = scalar_select %p29, %s30, %s31
      %p35 = pneg %p29
      %p36 = scmp.eq.s32.totalorder %s20, 1
      %p37 = por %p35, %p36
      %p38 = scmp.ne.s32.totalorder %s30, %s33
      %p39 = scmp.eq.s32.totalorder %s20, 0
      %p40 = por %p38, %p39
      %p41 = scmp.ne.s32.totalorder %s30, %s33
      %p42 = scmp.eq.s32.totalorder %s25, 1
      %p43 = por %p41, %p42
      %p44 = scmp.ne.s32.totalorder %s33, %s34
      %p45 = scmp.eq.s32.totalorder %s25, 0
      %p46 = por %p44, %p45
      %p47 = scmp.ne.s32.totalorder %s33, %s34
      %p48 = scmp.eq.s32.totalorder %s26, 1
      %p49 = por %p47, %p48
      %p51 = scmp.ne.s32.totalorder %s34, %s50
      %p52 = scmp.eq.s32.totalorder %s26, 0
      %p53 = por %p51, %p52
      %s55 = sadd.s32 %s54, 1
      %p58 = scmp.eq.s32.totalorder %s20, 1
      %p59 = scmp.ne.s32.totalorder %s54, %s56
      %p60 = scmp.eq.s32.totalorder %s20, 0
      %p61 = por %p59, %p60
      %p62 = scmp.ne.s32.totalorder %s54, %s56
      %p63 = scmp.eq.s32.totalorder %s25, 1
      %p64 = por %p62, %p63
      %p65 = scmp.ne.s32.totalorder %s56, %s57
      %p66 = scmp.eq.s32.totalorder %s25, 0
      %p67 = por %p65, %p66
      %p68 = scmp.ne.s32.totalorder %s56, %s57
      %p69 = scmp.eq.s32.totalorder %s26, 1
      %p70 = por %p68, %p69
      %p72 = scmp.ne.s32.totalorder %s57, %s71
      %p73 = scmp.eq.s32.totalorder %s26, 0
      %p74 = por %p72, %p73
      %s75 = ssub.s32 %s20, %s27
      %p76 = scmp.eq.s32.totalorder %s75, 0
      %s78 = sadd.s32 %s77, 1
      %s79 = scalar_select %p76, %s77, %s78
      %p82 = pneg %p76
      %p83 = scmp.eq.s32.totalorder %s20, 1
      %p84 = por %p82, %p83
      %p85 = scmp.ne.s32.totalorder %s77, %s80
      %p86 = scmp.eq.s32.totalorder %s20, 0
      %p87 = por %p85, %p86
      %p88 = scmp.ne.s32.totalorder %s77, %s80
      %p89 = scmp.eq.s32.totalorder %s25, 1
      %p90 = por %p88, %p89
      %p91 = scmp.ne.s32.totalorder %s80, %s81
      %p92 = scmp.eq.s32.totalorder %s25, 0
      %p93 = por %p91, %p92
      %p94 = scmp.ne.s32.totalorder %s80, %s81
      %p95 = scmp.eq.s32.totalorder %s26, 1
      %p96 = por %p94, %p95
      %p98 = scmp.ne.s32.totalorder %s81, %s97
      %p99 = scmp.eq.s32.totalorder %s26, 0
      %p100 = por %p98, %p99
      %s101 = ssub.s32 %s20, %s27
      %p102 = scmp.eq.s32.totalorder %s101, 0
      %s104 = sadd.s32 %s103, 1
      %s105 = scalar_select %p102, %s103, %s104
      %p108 = pneg %p102
      %p109 = scmp.eq.s32.totalorder %s20, 1
      %p110 = por %p108, %p109
      %p111 = scmp.ne.s32.totalorder %s103, %s106
      %p112 = scmp.eq.s32.totalorder %s20, 0
      %p113 = por %p111, %p112
      %p114 = scmp.ne.s32.totalorder %s103, %s106
      %p115 = scmp.eq.s32.totalorder %s25, 1
      %p116 = por %p114, %p115
      %p117 = scmp.ne.s32.totalorder %s106, %s107
      %p118 = scmp.eq.s32.totalorder %s25, 0
      %p119 = por %p117, %p118
      %p120 = scmp.ne.s32.totalorder %s106, %s107
      %p121 = scmp.eq.s32.totalorder %s26, 1
      %p122 = por %p120, %p121
      %p124 = scmp.ne.s32.totalorder %s107, %s123
      %p125 = scmp.eq.s32.totalorder %s26, 0
      %p126 = por %p124, %p125
      %p127 = scmp.le.s32.totalorder 1, %s20
      %p128 = scmp.lt.s32.totalorder %s20, 3
      %p129 = pnand %p127, %p128
      %p130 = pneg %p129
      // Predicated region
      $region9: #{tpu_custom_call.1} parent=5 // pred_check
        _
      $region10: #{tpu_custom_call.1} parent=5 // pred_check_branch
        %132 = sbr.rel (%p129) target = $region12
      $region11: #{tpu_custom_call.1} parent=5 // pred_region
        %s133 = ssub.s32 %s20, 1
        // Predicated region
        $region13: #{tpu_custom_call.1} parent=11 // pred_check
          %p134 = pneg %p67
        $region14: #{tpu_custom_call.1} parent=11 // pred_check_branch
          %136 = sbr.rel (%p134) target = $region16
        $region15: #{tpu_custom_call.1} parent=11 // pred_region
          %s138 = ssub.s32 3072, 3072
          %139 = vsyncadd [#allocation6], %s138
          %s140 = sshll.u32 [#allocation5], 4
          %s141 = int_to_ptr.vmem [resolvable:$true] %s140
          %146 = dma.hbm_to_vmem [thread:$0]  %s1, 3072, %s141, [#allocation6], 128, 128, 8
        $region16: #{tpu_custom_call.1} parent=11 // pred_fallthru
          _
      $region12: #{tpu_custom_call.1} parent=5 // pred_fallthru
        _
      %p147 = scmp.lt.s32.totalorder %s20, 2
      // Predicated region
      $region17: #{tpu_custom_call.1} parent=5 // pred_check
        %p148 = pneg %p147
      $region18: #{tpu_custom_call.1} parent=5 // pred_check_branch
        %150 = sbr.rel (%p148) target = $region20
      $region19: #{tpu_custom_call.1} parent=5 // pred_region
        // Predicated region
        $region21: #{tpu_custom_call.1} parent=19 // pred_check
          %p151 = pneg %p40
        $region22: #{tpu_custom_call.1} parent=19 // pred_check_branch
          %153 = sbr.rel (%p151) target = $region24
        $region23: #{tpu_custom_call.1} parent=19 // pred_region
          %s154 = sand.u32 %s30, 1
          %s155 = scalar_lea.sflag [#allocation3], %s154
          %s156 = sand.u32 %s30, 1
          %s157 = smul.addr %s156, 64
          %s158 = scalar_lea.vmem [#allocation2], %s157
          %s160 = ssub.s32 1024, 1024
          %161 = vsyncadd %s155, %s160
          %s162 = smul.addr %s20, 8
          %s163 = smul.addr %s162, 128
          %s164 = scalar_lea.hbm %s0, %s163
          %s165 = sshll.u32 %s158, 4
          %s166 = int_to_ptr.vmem [resolvable:$true] %s165
          %171 = dma.hbm_to_vmem [thread:$0]  %s164, 1024, %s166, %s155, 128, 128, 8
        $region24: #{tpu_custom_call.1} parent=19 // pred_fallthru
          _
      $region20: #{tpu_custom_call.1} parent=5 // pred_fallthru
        _
      %p172 = scmp.le.s32.totalorder 1, %s20
      %p173 = scmp.lt.s32.totalorder %s20, 3
      %p174 = pnand %p172, %p173
      %p175 = pneg %p174
      // Predicated region
      $region25: #{tpu_custom_call.1} parent=5 // pred_check
        _
      $region26: #{tpu_custom_call.1} parent=5 // pred_check_branch
        %177 = sbr.rel (%p174) target = $region28
      $region27: #{tpu_custom_call.1} parent=5 // pred_region
        %s178 = ssub.s32 %s20, 1
        %s179 = sand.u32 %s33, 1
        %s180 = scalar_lea.sflag [#allocation3], %s179
        %s181 = sand.u32 %s33, 1
        %s182 = smul.addr %s181, 64
        %s183 = scalar_lea.vmem [#allocation2], %s182
        // Predicated region
        $region29: #{tpu_custom_call.1} parent=27 // pred_check
          %p184 = pneg %p46
        $region30: #{tpu_custom_call.1} parent=27 // pred_check_branch
          %186 = sbr.rel (%p184) target = $region32
        $region31: #{tpu_custom_call.1} parent=27 // pred_region
          %187 = dma.done %s180, 1024
        $region32: #{tpu_custom_call.1} parent=27 // pred_fallthru
          _
        // Predicated region
        $region33: #{tpu_custom_call.1} parent=27 // pred_check
          %p188 = pneg %p67
        $region34: #{tpu_custom_call.1} parent=27 // pred_check_branch
          %190 = sbr.rel (%p188) target = $region36
        $region35: #{tpu_custom_call.1} parent=27 // pred_region
          %191 = dma.done [#allocation6], 3072
        $region36: #{tpu_custom_call.1} parent=27 // pred_fallthru
          _
        %s192 = sand.u32 %s33, 1
        %s193 = scalar_lea.sflag [#allocation3], %s192
        %s194 = sand.u32 %s33, 1
        %s195 = smul.addr %s194, 64
        %s196 = scalar_lea.vmem [#allocation2], %s195
        %p197 = pneg %p46
        %p198 = pneg %p43
        %p199 = pneg %p67
        %p200 = pneg %p64
        %p201 = pneg %p93
        %p202 = pneg %p90
        %s203 = sand.u32 %s80, 1
        %s204 = scalar_lea.sflag [#allocation4], %s203
        %s205 = sand.u32 %s80, 1
        %s206 = smul.addr %s205, 16
        %s207 = scalar_lea.vmem [#allocation7], %s206
        %p208 = pneg %p119
        %p209 = pneg %p116
        %s210 = sand.u32 %s106, 1
        %s211 = scalar_lea.sflag [#allocation9], %s210
        %s212 = sand.u32 %s106, 1
        %s213 = smul.addr %s212, 2
        %s214 = scalar_lea.vmem [#allocation8], %s213
        %v215 = vld [vmem:[%s183] sm:$0xff]
        %v216 = vld [vmem:[%s183 + $0x8] sm:$0xff]
        %s217 = scalar_lea.vmem %s183, 16 [#allocation2]
        %v218 = vld [vmem:[%s217] sm:$0xff]
        %v219 = vld [vmem:[%s217 + $0x8] sm:$0xff]
        %s220 = scalar_lea.vmem %s183, 32 [#allocation2]
        %v221 = vld [vmem:[%s220] sm:$0xff]
        %v222 = vld [vmem:[%s220 + $0x8] sm:$0xff]
        %s223 = scalar_lea.vmem %s183, 48 [#allocation2]
        %v224 = vld [vmem:[%s223] sm:$0xff]
        %v225 = vld [vmem:[%s223 + $0x8] sm:$0xff]
        %228 = vrot.lane.b32.xlu0 %v218, 16
        %v229 = vpop.permute.xlu0 %228
        %230 = vrot.lane.b32.xlu0 %v219, 16
        %v231 = vpop.permute.xlu0 %230
        %236 = vrot.lane.b32.xlu0 %v221, 32
        %v237 = vpop.permute.xlu0 %236
        %238 = vrot.lane.b32.xlu0 %v222, 32
        %v239 = vpop.permute.xlu0 %238
        %244 = vrot.lane.b32.xlu0 %v224, 48
        %v245 = vpop.permute.xlu0 %244
        %246 = vrot.lane.b32.xlu0 %v225, 48
        %v247 = vpop.permute.xlu0 %246
        %vm250 = vcmask 130048
        %v251 = vsel %vm250, %v215, %v229
        %v252 = vsel %vm250, %v216, %v231
        %vm253 = vcmask 261120
        %v254 = vsel %vm253, %v251, %v237
        %v255 = vsel %vm253, %v252, %v239
        %vm256 = vcmask 392192
        %v257 = vsel %vm256, %v254, %v245
        %v258 = vsel %vm256, %v255, %v247
        %v259 = vlaneseq
        %v260 = vshrl.u32 %v259, 7
        %v261 = vadd.s32 %v260, 8
        %vm262 = vcmp.eq.s32.totalorder %v260, 0
        %vm263 = vcmp.eq.s32.totalorder %v261, 0
        %v264 = vrot.slane %v257, 7
        %v265 = vrot.slane %v258, 7
        %vm266 = vcmp.lt.s32.totalorder %v260, 1
        %v267 = vsel %vm266, %v264, %v265
        %v268 = vsel %vm266, %v265, %v264
        %v269 = vsel %vm262, 0.0, %v268
        %v270 = vsel %vm263, 0.0, %v267
        %vm271 = vcmp.eq.s32.totalorder %v260, 15
        %vm272 = vcmp.eq.s32.totalorder %v261, 15
        %v273 = vrot.slane %v257, 1
        %v274 = vrot.slane %v258, 1
        %vm275 = vcmp.lt.s32.totalorder %v260, 7
        %v276 = vsel %vm275, %v273, %v274
        %v277 = vsel %vm275, %v274, %v273
        %v278 = vsel %vm271, 0.0, %v276
        %v279 = vsel %vm272, 0.0, %v277
        %282 = vrot.lane.b32.xlu0 %v257, 64
        %v283 = vpop.permute.xlu0 %282
        %284 = vrot.lane.b32.xlu0 %v258, 64
        %v285 = vpop.permute.xlu0 %284
        %vm288 = vcmask 523264
        %v289 = vsel %vm288, %v269, %v283
        %v290 = vsel %vm288, %v270, %v285
        %v291 = vld [vmem:[#allocation5] sm:$0xff]
        %v292 = vld [vmem:[#allocation5 + $0x8] sm:$0xff]
        %v293 = vld [vmem:[#allocation5 + $0x10] sm:$0xff]
        %v294 = vld [vmem:[#allocation5 + $0x18] sm:$0xff]
        %v295 = vld [vmem:[#allocation5 + $0x20] sm:$0xff]
        %v296 = vld [vmem:[#allocation5 + $0x28] sm:$0xff]
        %v297 = vld [vmem:[#allocation5 + $0x30] sm:$0xff]
        %v298 = vld [vmem:[#allocation5 + $0x38] sm:$0xff]
        %v299 = vld [vmem:[#allocation5 + $0x40] sm:$0xff]
        %v300 = vld [vmem:[#allocation5 + $0x48] sm:$0xff]
        %v301 = vld [vmem:[#allocation5 + $0x50] sm:$0xff]
        %v302 = vld [vmem:[#allocation5 + $0x58] sm:$0xff]
        %v303 = vld [vmem:[#allocation5 + $0x60] sm:$0xff]
        %v304 = vld [vmem:[#allocation5 + $0x68] sm:$0xff]
        %v305 = vld [vmem:[#allocation5 + $0x70] sm:$0xff]
        %v306 = vld [vmem:[#allocation5 + $0x78] sm:$0xff]
        %v307 = vld [vmem:[#allocation5 + $0x80] sm:$0xff]
        %v308 = vld [vmem:[#allocation5 + $0x88] sm:$0xff]
        %v309 = vld [vmem:[#allocation5 + $0x90] sm:$0xff]
        %v310 = vld [vmem:[#allocation5 + $0x98] sm:$0xff]
        %v311 = vld [vmem:[#allocation5 + $0xa0] sm:$0xff]
        %v312 = vld [vmem:[#allocation5 + $0xa8] sm:$0xff]
        %v313 = vld [vmem:[#allocation5 + $0xb0] sm:$0xff]
        %v314 = vld [vmem:[#allocation5 + $0xb8] sm:$0xff]
        %v316 = vsel %vm288, %v278, 0
        %v319 = vsel %vm288, %v279, 0
        %321 = vmatprep.subr.mxu0 0.0
        %322 = vmatpush1.msra.mxu0 %v291
        %323 = vmatprep.subr.mxu0 0.0
        %324 = vmatpush1.msra.mxu0 %v292
        %325 = vmatprep.subr.mxu0 0.0
        %326 = vmatpush1.msra.mxu0 %v293
        %327 = vmatprep.subr.mxu0 0.0
        %328 = vmatpush1.msra.mxu0 %v294
        %329 = vmatprep.subr.mxu0 0.0
        %330 = vmatpush1.msra.mxu0 %v295
        %331 = vmatprep.subr.mxu0 0.0
        %332 = vmatpush1.msra.mxu0 %v296
        %333 = vmatprep.subr.mxu0 0.0
        %334 = vmatpush1.msra.mxu0 %v297
        %335 = vmatprep.subr.mxu0 0.0
        %336 = vmatpush1.msra.mxu0 %v298
        %337 = vmatprep.subr.mxu0 0.0
        %338 = vmatpush1.msra.mxu0 %v299
        %339 = vmatprep.subr.mxu0 0.0
        %340 = vmatpush1.msra.mxu0 %v300
        %341 = vmatprep.subr.mxu0 0.0
        %342 = vmatpush1.msra.mxu0 %v301
        %343 = vmatprep.subr.mxu0 0.0
        %344 = vmatpush1.msra.mxu0 %v302
        %345 = vmatprep.subr.mxu0 0.0
        %346 = vmatpush1.msra.mxu0 %v303
        %347 = vmatprep.subr.mxu0 0.0
        %348 = vmatpush1.msra.mxu0 %v304
        %349 = vmatprep.subr.mxu0 0.0
        %350 = vmatpush1.msra.mxu0 %v305
        %351 = vmatprep.subr.mxu0 0.0
        %352 = vmatpush1.msra.mxu0 %v306
        %353 = vmatprep.subr.mxu0 0.0
        %354 = vmatpush1.msra.mxu0 %v307
        %355 = vmatprep.subr.mxu0 0.0
        %356 = vmatpush1.msra.mxu0 %v308
        %357 = vmatprep.subr.mxu0 0.0
        %358 = vmatpush1.msra.mxu0 %v309
        %359 = vmatprep.subr.mxu0 0.0
        %360 = vmatpush1.msra.mxu0 %v310
        %361 = vmatprep.subr.mxu0 0.0
        %362 = vmatpush1.msra.mxu0 %v311
        %363 = vmatprep.subr.mxu0 0.0
        %364 = vmatpush1.msra.mxu0 %v312
        %365 = vmatprep.subr.mxu0 0.0
        %366 = vmatpush1.msra.mxu0 %v313
        %367 = vmatprep.subr.mxu0 0.0
        %368 = vmatpush1.msra.mxu0 %v314
        %369 = vmatprep.subr.mxu0 0.0
        %370 = vmatpush1.msra.mxu0 0.0
        %371 = vmatprep.subr.mxu0 0.0
        %372 = vmatpush1.msra.mxu0 0.0
        %373 = vmatprep.subr.mxu0 0.0
        %374 = vmatpush1.msra.mxu0 0.0
        %375 = vmatprep.subr.mxu0 0.0
        %376 = vmatpush1.msra.mxu0 0.0
        %377 = vmatprep.subr.mxu0 0.0
        %378 = vmatpush1.msra.mxu0 0.0
        %379 = vmatprep.subr.mxu0 0.0
        %380 = vmatpush1.msra.mxu0 0.0
        %381 = vmatprep.subr.mxu0 0.0
        %382 = vmatpush1.msra.mxu0 0.0
        %383 = vmatprep.subr.mxu0 0.0
        %384 = vmatpush1.msra.mxu0 0.0
        %385 = vmatprep.mubr.f32.mxu0 %v316
        %386 = vmatmul.mubr.f32.gmra.mrb[0].mxu0 %v289
        %v387 = vpop.f32.mrb[0].mxu0
        %v388 = vadd.f32 0.0, %v387
        %v389 = vpop.f32.mrb[0].mxu0
        %390 = vmatprep.mubr.f32.mxu0 %v319
        %391 = vmatmul.mubr.f32.gmra.mrb[0].mxu0 %v290
        %v392 = vpop.f32.mrb[0].mxu0
        %v393 = vadd.f32 0.0, %v392
        %v394 = vpop.f32.mrb[0].mxu0
        %395 = vdwg.mxu0
        %396 = vst [vmem:[%s207] sm:$0xff] %v388
        %397 = vst [vmem:[%s207 + $0x8] sm:$0xff] %v393
        %v398 = vadd.f32 %v388, %v393
        %v399 = vrot.slane %v398, 4
        %v400 = vadd.f32 %v398, %v399
        %v401 = vrot.slane %v400, 2
        %v402 = vadd.f32 %v400, %v401
        %v403 = vrot.slane %v402, 1
        %v404 = vadd.f32 %v402, %v403
        %v405 = vmul.f32 %v388, %v388
        %v406 = vmul.f32 %v393, %v393
        %v407 = vadd.f32 %v405, %v406
        %v408 = vrot.slane %v407, 4
        %v409 = vadd.f32 %v407, %v408
        %v410 = vrot.slane %v409, 2
        %v411 = vadd.f32 %v409, %v410
        %v412 = vrot.slane %v411, 1
        %v413 = vadd.f32 %v411, %v412
        %vm414 = vcmask 1040384
        %v415 = vsel %vm414, %v404, %v413
        %416 = vst [vmem:[%s214] sm:$0x3] %v415
        %s417 = sand.u32 %s80, 1
        %s418 = scalar_lea.sflag [#allocation4], %s417
        %s419 = sand.u32 %s80, 1
        %s420 = smul.addr %s419, 16
        %s421 = scalar_lea.vmem [#allocation7], %s420
        %s422 = sand.u32 %s106, 1
        %s423 = scalar_lea.sflag [#allocation9], %s422
        %s424 = sand.u32 %s106, 1
        %s425 = smul.addr %s424, 2
        %s426 = scalar_lea.vmem [#allocation8], %s425
        // Predicated region
        $region37: #{tpu_custom_call.1} parent=27 // pred_check
          %p427 = pneg %p90
        $region38: #{tpu_custom_call.1} parent=27 // pred_check_branch
          %429 = sbr.rel (%p427) target = $region40
        $region39: #{tpu_custom_call.1} parent=27 // pred_region
          %s431 = ssub.s32 256, 256
          %432 = vsyncadd %s418, %s431
          %s433 = smul.addr %s25, 2
          %s434 = smul.addr %s433, 128
          %s435 = scalar_lea.hbm %s2, %s434
          %s436 = sshll.u32 %s421, 4
          %s437 = int_to_ptr.vmem [resolvable:$true] %s436
          %442 = dma.vmem_to_hbm [thread:$0]  %s437, 256, %s435, %s418, 128, 128, 8
        $region40: #{tpu_custom_call.1} parent=27 // pred_fallthru
          _
        // Predicated region
        $region41: #{tpu_custom_call.1} parent=27 // pred_check
          %p443 = pneg %p116
        $region42: #{tpu_custom_call.1} parent=27 // pred_check_branch
          %445 = sbr.rel (%p443) target = $region44
        $region43: #{tpu_custom_call.1} parent=27 // pred_region
          %s447 = ssub.s32 32, 32
          %448 = vsyncadd %s423, %s447
          %s449 = smul.addr %s25, 32
          %s450 = scalar_lea.hbm %s3, %s449
          %s452 = sshll.u32 %s426, 4
          %s453 = int_to_ptr.vmem [resolvable:$true] %s452
          %455 = dma.vmem_to_hbm [thread:$0]  %s453, 32, %s450, %s423
        $region44: #{tpu_custom_call.1} parent=27 // pred_fallthru
          _
      $region28: #{tpu_custom_call.1} parent=5 // pred_fallthru
        _
      %p456 = scmp.le.s32.totalorder 2, %s20
      // Predicated region
      $region45: #{tpu_custom_call.1} parent=5 // pred_check
        %p457 = pneg %p456
      $region46: #{tpu_custom_call.1} parent=5 // pred_check_branch
        %459 = sbr.rel (%p457) target = $region48
      $region47: #{tpu_custom_call.1} parent=5 // pred_region
        %s460 = ssub.s32 %s20, 2
        // Predicated region
        $region49: #{tpu_custom_call.1} parent=47 // pred_check
          %p461 = pneg %p96
        $region50: #{tpu_custom_call.1} parent=47 // pred_check_branch
          %463 = sbr.rel (%p461) target = $region52
        $region51: #{tpu_custom_call.1} parent=47 // pred_region
          %s464 = sand.u32 %s81, 1
          %s465 = scalar_lea.sflag [#allocation4], %s464
          %s466 = sand.u32 %s81, 1
          %s467 = smul.addr %s466, 16
          %s468 = scalar_lea.vmem [#allocation7], %s467
          %469 = dma.done %s465, 256
        $region52: #{tpu_custom_call.1} parent=47 // pred_fallthru
          _
        // Predicated region
        $region53: #{tpu_custom_call.1} parent=47 // pred_check
          %p470 = pneg %p122
        $region54: #{tpu_custom_call.1} parent=47 // pred_check_branch
          %472 = sbr.rel (%p470) target = $region56
        $region55: #{tpu_custom_call.1} parent=47 // pred_region
          %s473 = sand.u32 %s107, 1
          %s474 = scalar_lea.sflag [#allocation9], %s473
          %s475 = sand.u32 %s107, 1
          %s476 = smul.addr %s475, 2
          %s477 = scalar_lea.vmem [#allocation8], %s476
          %478 = dma.done %s474, 32
        $region56: #{tpu_custom_call.1} parent=47 // pred_fallthru
          _
      $region48: #{tpu_custom_call.1} parent=5 // pred_fallthru
        _
    $region6: #{tpu_custom_call.1} parent=1 // loop_footer
      %s24 = sadd.s32 1, %s20
    $region7: #{tpu_custom_call.1} parent=1 // loop_footer_branch
      %19 = sbr.rel target = $region3
    $region8: #{tpu_custom_call.1} parent=1 // loop_exit
      _
    %479 = vsyncpa [#allocation3], 1
    %s480 = scalar_lea.sflag [#allocation3], 1
    %481 = vsyncpa %s480, 1
    %482 = vsyncpa [#allocation6], 1
    %483 = vsyncpa [#allocation4], 1
    %s484 = scalar_lea.sflag [#allocation4], 1
    %485 = vsyncpa %s484, 1
    %486 = vsyncpa [#allocation9], 1
    %s487 = scalar_lea.sflag [#allocation9], 1
    %488 = vsyncpa %s487, 1

</llo_original>
